<compile_context>
chip_gen: v7x
topology: tpu7x:2x2x1
jax: 0.10.0
libtpu: 0.0.40
codegen_flags: <defaults>
</compile_context>

<pallas_src>
import functools

import jax
import jax.numpy as jnp
import numpy as np
from jax import lax
from jax.experimental import pallas as pl
from jax.experimental.pallas import tpu as pltpu

# ----- module config (small, consistent with ResK1KX structure_info) -----
N = 2          # batch
IN_CH = 4      # 'in'
OUT_CH = 8     # 'out'
BTN_CH = 16    # 'btn'
K = 3          # 'k'
PAD = (K - 1) // 2
H = W = 16     # spatial
EPS = 1e-5


# --------------------------- Pallas kernel ---------------------------------
def _resk1kx_kernel(x_ref, wf_ref, bf_ref, w2_ref, b2_ref, mask_ref,
                    o_ref, patch_ref, *, k, pad, w_img, cb):
    # x_ref:     (Cin, N*H*W)            activations, batch folded onto lanes
    # wf_ref:    (Cb + Cout, Cin)        conv1 + residual_proj fused (BN folded)
    # bf_ref:    (Cb + Cout, 1)
    # w2_ref:    (Cout, k*k*Cb)          im2col conv2 weight (BN folded)
    # b2_ref:    (Cout, 1)
    # mask_ref:  (k*k, N*H*W)            precomputed border-validity masks (f32)
    # o_ref:     (Cout, N*H*W)           single lane-dense output slab
    # patch_ref: (k*k*Cb, N*H*W)         VMEM im2col scratch
    m = x_ref.shape[1]

    # ---- fused 1x1 convs (conv1 + residual_proj): one weight-stationary matmul
    fused = jnp.dot(wf_ref[...], x_ref[...],
                    preferred_element_type=jnp.float32) + bf_ref[...]
    hid = jnp.maximum(fused[:cb, :], 0.0)     # bottleneck, post-ReLU   (Cb, M)
    res = fused[cb:, :]                       # residual branch         (Cout, M)

    # ---- im2col via lane rotations + precomputed masks -> (k*k*Cb, M) scratch
    # Rolling over the full N*H*W axis crosses batch boundaries / wraps at the
    # array end, but the per-tap masks zero exactly those lanes, so the folded
    # layout stays correct for stride=1.
    for dy in range(k):
        sy = dy - pad
        for dx in range(k):
            sx = dx - pad
            s = sy * w_img + sx               # flat-index shift of this tap
            shifted = hid if s == 0 else pltpu.roll(hid, shift=(-s) % m, axis=1)
            t = dy * k + dx
            patch_ref[pl.ds(t * cb, cb), :] = shifted * mask_ref[pl.ds(t, 1), :]

    # ---- conv2 as ONE K = k*k*Cb matmul, residual add, final ReLU, one store
    out = jnp.dot(w2_ref[...], patch_ref[...],
                  preferred_element_type=jnp.float32) + b2_ref[...]
    o_ref[...] = jnp.maximum(out + res, 0.0).astype(o_ref.dtype)


# --------------------------- wrapper ----------------------------------------
def resk1kx_forward(x_nchw, wfused, bfused, w2, b2, mask):
    """x_nchw: [N, Cin, H, W] float32 -> [N, Cout, H, W] float32."""
    n, cin, h, w = x_nchw.shape
    hw = h * w
    m = n * hw
    cout = w2.shape[0]
    cb = wfused.shape[0] - cout
    kk_cb = w2.shape[1]

    # (N, Cin, H, W) -> (Cin, N*H*W): tiny host-side transpose (8 KiB), so the
    # kernel's matmul RHS is read straight from the input ref, no in-kernel copy.
    x = jnp.transpose(x_nchw.reshape(n, cin, hw), (1, 0, 2)).reshape(cin, m)

    flops = 2 * m * cin * (cb + cout) + 2 * m * kk_cb * cout + 5 * m * cout + m * cb
    bytes_accessed = 4 * (x.size + wfused.size + bfused.size + w2.size
                          + b2.size + mask.size + cout * m)

    kernel = functools.partial(_resk1kx_kernel, k=K, pad=PAD, w_img=w, cb=cb)
    out = pl.pallas_call(
        kernel,
        out_shape=jax.ShapeDtypeStruct((cout, m), jnp.float32),
        in_specs=[pl.BlockSpec(memory_space=pltpu.MemorySpace.VMEM)] * 6,
        out_specs=pl.BlockSpec(memory_space=pltpu.MemorySpace.VMEM),
        scratch_shapes=[pltpu.VMEM((K * K * cb, m), jnp.float32)],
        cost_estimate=pl.CostEstimate(flops=flops, transcendentals=0,
                                      bytes_accessed=bytes_accessed),
    )(x, wfused, bfused, w2, b2, mask)

    # (Cout, N*H*W) -> (N, Cout, H, W)
    return jnp.transpose(out.reshape(cout, n, h, w), (1, 0, 2, 3))


# ------------------------ parameter construction ----------------------------
def _fold_bn(w_hwio, gamma, beta, mean, var, eps=EPS):
    """Fold eval-mode BatchNorm into a bias-free conv (HWIO weights)."""
    scale = gamma / jnp.sqrt(var + eps)
    return w_hwio * scale, beta - mean * scale


def make_tap_masks(n, h, w, k, pad):
    """(k*k, N*H*W) f32 border-validity masks for the lane-folded roll im2col."""
    j = np.arange(n * h * w)
    xx = j % w
    yy = (j // w) % h
    masks = []
    for dy in range(k):
        sy = dy - pad
        for dx in range(k):
            sx = dx - pad
            valid = ((xx + sx >= 0) & (xx + sx < w) &
                     (yy + sy >= 0) & (yy + sy < h))
            masks.append(valid.astype(np.float32))
    return jnp.asarray(np.stack(masks, axis=0))


def make_params(key):
    ks = jax.random.split(key, 15)
    f32 = jnp.float32

    def bn(kg, kb, km, kv, c):
        gamma = 1.0 + 0.1 * jax.random.normal(kg, (c,), f32)
        beta = 0.1 * jax.random.normal(kb, (c,), f32)
        mean = 0.1 * jax.random.normal(km, (c,), f32)
        var = jax.random.uniform(kv, (c,), f32, 0.5, 1.5)
        return gamma, beta, mean, var

    # conv1: 1x1, IN_CH -> BTN_CH (bias-free conv + BN)
    w1_raw = 0.2 * jax.random.normal(ks[0], (1, 1, IN_CH, BTN_CH), f32)
    bn1 = bn(ks[1], ks[2], ks[3], ks[4], BTN_CH)
    # conv2: KxK, BTN_CH -> OUT_CH (bias-free conv + BN)
    w2_raw = 0.2 * jax.random.normal(ks[5], (K, K, BTN_CH, OUT_CH), f32)
    bn2 = bn(ks[6], ks[7], ks[8], ks[9], OUT_CH)
    # residual_proj: 1x1, IN_CH -> OUT_CH (bias-free conv + BN)
    wp_raw = 0.2 * jax.random.normal(ks[10], (1, 1, IN_CH, OUT_CH), f32)
    bnp = bn(ks[11], ks[12], ks[13], ks[14], OUT_CH)

    w1f, b1f = _fold_bn(w1_raw, *bn1)
    w2f, b2f = _fold_bn(w2_raw, *bn2)
    wpf, bpf = _fold_bn(wp_raw, *bnp)

    raw = (w1f, b1f, w2f, b2f, wpf, bpf)  # HWIO folded weights (for reference)

    # Host-side packing into the exact kernel layouts (weight-stationary):
    #   wfused: (Cb+Cout, Cin)  rows [0:Cb)  -> conv1, rows [Cb:) -> residual_proj
    #   w2m:    (Cout, k*k*Cb)  column index = (dy*k + dx)*Cb + c  (im2col order)
    w1m = jnp.transpose(w1f.reshape(IN_CH, BTN_CH))           # (Cb, Cin)
    wpm = jnp.transpose(wpf.reshape(IN_CH, OUT_CH))           # (Cout, Cin)
    wfused = jnp.concatenate([w1m, wpm], axis=0)              # (Cb+Cout, Cin)
    bfused = jnp.concatenate([b1f, bpf]).reshape(-1, 1)       # (Cb+Cout, 1)
    w2m = jnp.transpose(w2f.reshape(K * K * BTN_CH, OUT_CH))  # (Cout, k*k*Cb)
    b2m = b2f.reshape(OUT_CH, 1)

    mask = make_tap_masks(N, H, W, K, PAD)                    # (k*k, N*H*W)
    packed = (wfused, bfused, w2m, b2m, mask)
    return raw, packed


# ------------------------------ reference -----------------------------------
def reference_forward(x_nchw, raw):
    w1f, b1f, w2f, b2f, wpf, bpf = raw
    dn = ('NHWC', 'HWIO', 'NHWC')
    x = jnp.transpose(x_nchw, (0, 2, 3, 1))
    h = lax.conv_general_dilated(x, w1f, (1, 1), 'VALID', dimension_numbers=dn) + b1f
    h = jnp.maximum(h, 0.0)
    y = lax.conv_general_dilated(h, w2f, (1, 1), [(PAD, PAD), (PAD, PAD)],
                                 dimension_numbers=dn) + b2f
    r = lax.conv_general_dilated(x, wpf, (1, 1), 'VALID', dimension_numbers=dn) + bpf
    out = jnp.maximum(y + r, 0.0)
    return jnp.transpose(out, (0, 3, 1, 2))


# ------------------------------ main -----------------------------------------
if __name__ == "__main__":
    key = jax.random.PRNGKey(0)
    kx, kp = jax.random.split(key)
    x = jax.random.normal(kx, (N, IN_CH, H, W), jnp.float32)  # NCHW like PyTorch
    raw, packed = make_params(kp)

    out = resk1kx_forward(x, *packed)
    out = jax.block_until_ready(out)

    ref = jax.block_until_ready(reference_forward(x, raw))
    np.testing.assert_allclose(np.asarray(out), np.asarray(ref),
                               rtol=1e-4, atol=1e-4)
    assert out.shape == (N, OUT_CH, H, W)
    print("KERNEL_OK")
</pallas_src>

<mosaic_0001>
module attributes {stable_mosaic.version = 11 : i64} {
  func.func @_resk1kx_kernel(%arg0: memref<4x512xf32, #tpu.memory_space<vmem>>, %arg1: memref<24x4xf32, #tpu.memory_space<vmem>>, %arg2: memref<24x1xf32, #tpu.memory_space<vmem>>, %arg3: memref<8x144xf32, #tpu.memory_space<vmem>>, %arg4: memref<8x1xf32, #tpu.memory_space<vmem>>, %arg5: memref<9x512xf32, #tpu.memory_space<vmem>>, %arg6: memref<8x512xf32, #tpu.memory_space<vmem>>, %arg7: memref<144x512xf32, #tpu.memory_space<vmem>>) attributes {dimension_semantics = [], scalar_prefetch = 0 : i64, scratch_operands = 1 : i64, tpu.core_type = #tpu.core_type<tc>} {
    %c0 = arith.constant 0 : index
    %c0_0 = arith.constant 0 : index
    %0 = vector.load %arg1[%c0, %c0_0] : memref<24x4xf32, #tpu.memory_space<vmem>>, vector<24x4xf32>
    %c0_1 = arith.constant 0 : index
    %c0_2 = arith.constant 0 : index
    %1 = vector.load %arg0[%c0_1, %c0_2] : memref<4x512xf32, #tpu.memory_space<vmem>>, vector<4x512xf32>
    %cst = arith.constant dense<0.000000e+00> : vector<24x512xf32>
    %2 = tpu.matmul %0, %1, %cst {dimension_numbers = #tpu.dot_dimension_numbers<[1], [0], [0], [1], [0, 0, 1, 1], [], []>} : vector<24x4xf32>, vector<4x512xf32>, vector<24x512xf32> -> vector<24x512xf32>
    %c0_3 = arith.constant 0 : index
    %c0_4 = arith.constant 0 : index
    %3 = vector.load %arg2[%c0_3, %c0_4] : memref<24x1xf32, #tpu.memory_space<vmem>>, vector<24x1xf32>
    %4 = vector.broadcast %3 : vector<24x1xf32> to vector<24x512xf32>
    %5 = arith.addf %2, %4 : vector<24x512xf32>
    %6 = vector.extract_strided_slice %5 {offsets = [0, 0], sizes = [16, 512], strides = [1, 1]} : vector<24x512xf32> to vector<16x512xf32>
    %cst_5 = arith.constant 0.000000e+00 : f32
    %7 = vector.broadcast %cst_5 : f32 to vector<16x512xf32>
    %8 = arith.maximumf %6, %7 : vector<16x512xf32>
    %9 = vector.extract_strided_slice %5 {offsets = [16, 0], sizes = [8, 512], strides = [1, 1]} : vector<24x512xf32> to vector<8x512xf32>
    %c17_i32 = arith.constant 17 : i32
    %10 = tpu.dynamic_rotate %8 by %c17_i32 dim 1 : vector<16x512xf32>, i32 -> vector<16x512xf32>
    %c0_6 = arith.constant 0 : index
    %c0_7 = arith.constant 0 : index
    %11 = vector.load %arg5[%c0_6, %c0_7] : memref<9x512xf32, #tpu.memory_space<vmem>>, vector<1x512xf32>
    %12 = vector.broadcast %11 : vector<1x512xf32> to vector<16x512xf32>
    %13 = arith.mulf %10, %12 : vector<16x512xf32>
    %c0_8 = arith.constant 0 : index
    %c0_9 = arith.constant 0 : index
    %14 = vector.load %arg7[%c0_8, %c0_9] : memref<144x512xf32, #tpu.memory_space<vmem>>, vector<16x512xf32>
    tpu.vector_store %arg7[%c0_8, %c0_9], %13 {strides = array<i32>} : memref<144x512xf32, #tpu.memory_space<vmem>>, vector<16x512xf32>,
    %c16_i32 = arith.constant 16 : i32
    %15 = tpu.dynamic_rotate %8 by %c16_i32 dim 1 : vector<16x512xf32>, i32 -> vector<16x512xf32>
    %c1 = arith.constant 1 : index
    %c0_10 = arith.constant 0 : index
    %16 = vector.load %arg5[%c1, %c0_10] : memref<9x512xf32, #tpu.memory_space<vmem>>, vector<1x512xf32>
    %17 = vector.broadcast %16 : vector<1x512xf32> to vector<16x512xf32>
    %18 = arith.mulf %15, %17 : vector<16x512xf32>
    %c16 = arith.constant 16 : index
    %c0_11 = arith.constant 0 : index
    %19 = vector.load %arg7[%c16, %c0_11] : memref<144x512xf32, #tpu.memory_space<vmem>>, vector<16x512xf32>
    tpu.vector_store %arg7[%c16, %c0_11], %18 {strides = array<i32>} : memref<144x512xf32, #tpu.memory_space<vmem>>, vector<16x512xf32>,
    %c15_i32 = arith.constant 15 : i32
    %20 = tpu.dynamic_rotate %8 by %c15_i32 dim 1 : vector<16x512xf32>, i32 -> vector<16x512xf32>
    %c2 = arith.constant 2 : index
    %c0_12 = arith.constant 0 : index
    %21 = vector.load %arg5[%c2, %c0_12] : memref<9x512xf32, #tpu.memory_space<vmem>>, vector<1x512xf32>
    %22 = vector.broadcast %21 : vector<1x512xf32> to vector<16x512xf32>
    %23 = arith.mulf %20, %22 : vector<16x512xf32>
    %c32 = arith.constant 32 : index
    %c0_13 = arith.constant 0 : index
    %24 = vector.load %arg7[%c32, %c0_13] : memref<144x512xf32, #tpu.memory_space<vmem>>, vector<16x512xf32>
    tpu.vector_store %arg7[%c32, %c0_13], %23 {strides = array<i32>} : memref<144x512xf32, #tpu.memory_space<vmem>>, vector<16x512xf32>,
    %c1_i32 = arith.constant 1 : i32
    %25 = tpu.dynamic_rotate %8 by %c1_i32 dim 1 : vector<16x512xf32>, i32 -> vector<16x512xf32>
    %c3 = arith.constant 3 : index
    %c0_14 = arith.constant 0 : index
    %26 = vector.load %arg5[%c3, %c0_14] : memref<9x512xf32, #tpu.memory_space<vmem>>, vector<1x512xf32>
    %27 = vector.broadcast %26 : vector<1x512xf32> to vector<16x512xf32>
    %28 = arith.mulf %25, %27 : vector<16x512xf32>
    %c48 = arith.constant 48 : index
    %c0_15 = arith.constant 0 : index
    %29 = vector.load %arg7[%c48, %c0_15] : memref<144x512xf32, #tpu.memory_space<vmem>>, vector<16x512xf32>
    tpu.vector_store %arg7[%c48, %c0_15], %28 {strides = array<i32>} : memref<144x512xf32, #tpu.memory_space<vmem>>, vector<16x512xf32>,
    %c4 = arith.constant 4 : index
    %c0_16 = arith.constant 0 : index
    %30 = vector.load %arg5[%c4, %c0_16] : memref<9x512xf32, #tpu.memory_space<vmem>>, vector<1x512xf32>
    %31 = vector.broadcast %30 : vector<1x512xf32> to vector<16x512xf32>
    %32 = arith.mulf %8, %31 : vector<16x512xf32>
    %c64 = arith.constant 64 : index
    %c0_17 = arith.constant 0 : index
    %33 = vector.load %arg7[%c64, %c0_17] : memref<144x512xf32, #tpu.memory_space<vmem>>, vector<16x512xf32>
    tpu.vector_store %arg7[%c64, %c0_17], %32 {strides = array<i32>} : memref<144x512xf32, #tpu.memory_space<vmem>>, vector<16x512xf32>,
    %c511_i32 = arith.constant 511 : i32
    %34 = tpu.dynamic_rotate %8 by %c511_i32 dim 1 : vector<16x512xf32>, i32 -> vector<16x512xf32>
    %c5 = arith.constant 5 : index
    %c0_18 = arith.constant 0 : index
    %35 = vector.load %arg5[%c5, %c0_18] : memref<9x512xf32, #tpu.memory_space<vmem>>, vector<1x512xf32>
    %36 = vector.broadcast %35 : vector<1x512xf32> to vector<16x512xf32>
    %37 = arith.mulf %34, %36 : vector<16x512xf32>
    %c80 = arith.constant 80 : index
    %c0_19 = arith.constant 0 : index
    %38 = vector.load %arg7[%c80, %c0_19] : memref<144x512xf32, #tpu.memory_space<vmem>>, vector<16x512xf32>
    tpu.vector_store %arg7[%c80, %c0_19], %37 {strides = array<i32>} : memref<144x512xf32, #tpu.memory_space<vmem>>, vector<16x512xf32>,
    %c497_i32 = arith.constant 497 : i32
    %39 = tpu.dynamic_rotate %8 by %c497_i32 dim 1 : vector<16x512xf32>, i32 -> vector<16x512xf32>
    %c6 = arith.constant 6 : index
    %c0_20 = arith.constant 0 : index
    %40 = vector.load %arg5[%c6, %c0_20] : memref<9x512xf32, #tpu.memory_space<vmem>>, vector<1x512xf32>
    %41 = vector.broadcast %40 : vector<1x512xf32> to vector<16x512xf32>
    %42 = arith.mulf %39, %41 : vector<16x512xf32>
    %c96 = arith.constant 96 : index
    %c0_21 = arith.constant 0 : index
    %43 = vector.load %arg7[%c96, %c0_21] : memref<144x512xf32, #tpu.memory_space<vmem>>, vector<16x512xf32>
    tpu.vector_store %arg7[%c96, %c0_21], %42 {strides = array<i32>} : memref<144x512xf32, #tpu.memory_space<vmem>>, vector<16x512xf32>,
    %c496_i32 = arith.constant 496 : i32
    %44 = tpu.dynamic_rotate %8 by %c496_i32 dim 1 : vector<16x512xf32>, i32 -> vector<16x512xf32>
    %c7 = arith.constant 7 : index
    %c0_22 = arith.constant 0 : index
    %45 = vector.load %arg5[%c7, %c0_22] : memref<9x512xf32, #tpu.memory_space<vmem>>, vector<1x512xf32>
    %46 = vector.broadcast %45 : vector<1x512xf32> to vector<16x512xf32>
    %47 = arith.mulf %44, %46 : vector<16x512xf32>
    %c112 = arith.constant 112 : index
    %c0_23 = arith.constant 0 : index
    %48 = vector.load %arg7[%c112, %c0_23] : memref<144x512xf32, #tpu.memory_space<vmem>>, vector<16x512xf32>
    tpu.vector_store %arg7[%c112, %c0_23], %47 {strides = array<i32>} : memref<144x512xf32, #tpu.memory_space<vmem>>, vector<16x512xf32>,
    %c495_i32 = arith.constant 495 : i32
    %49 = tpu.dynamic_rotate %8 by %c495_i32 dim 1 : vector<16x512xf32>, i32 -> vector<16x512xf32>
    %c8 = arith.constant 8 : index
    %c0_24 = arith.constant 0 : index
    %50 = vector.load %arg5[%c8, %c0_24] : memref<9x512xf32, #tpu.memory_space<vmem>>, vector<1x512xf32>
    %51 = vector.broadcast %50 : vector<1x512xf32> to vector<16x512xf32>
    %52 = arith.mulf %49, %51 : vector<16x512xf32>
    %c128 = arith.constant 128 : index
    %c0_25 = arith.constant 0 : index
    %53 = vector.load %arg7[%c128, %c0_25] : memref<144x512xf32, #tpu.memory_space<vmem>>, vector<16x512xf32>
    tpu.vector_store %arg7[%c128, %c0_25], %52 {strides = array<i32>} : memref<144x512xf32, #tpu.memory_space<vmem>>, vector<16x512xf32>,
    %c0_26 = arith.constant 0 : index
    %c0_27 = arith.constant 0 : index
    %54 = vector.load %arg3[%c0_26, %c0_27] : memref<8x144xf32, #tpu.memory_space<vmem>>, vector<8x144xf32>
    %c0_28 = arith.constant 0 : index
    %c0_29 = arith.constant 0 : index
    %55 = vector.load %arg7[%c0_28, %c0_29] : memref<144x512xf32, #tpu.memory_space<vmem>>, vector<144x512xf32>
    %cst_30 = arith.constant dense<0.000000e+00> : vector<8x512xf32>
    %56 = tpu.matmul %54, %55, %cst_30 {dimension_numbers = #tpu.dot_dimension_numbers<[1], [0], [0], [1], [0, 0, 1, 1], [], []>} : vector<8x144xf32>, vector<144x512xf32>, vector<8x512xf32> -> vector<8x512xf32>
    %c0_31 = arith.constant 0 : index
    %c0_32 = arith.constant 0 : index
    %57 = vector.load %arg4[%c0_31, %c0_32] : memref<8x1xf32, #tpu.memory_space<vmem>>, vector<8x1xf32>
    %58 = vector.broadcast %57 : vector<8x1xf32> to vector<8x512xf32>
    %59 = arith.addf %56, %58 : vector<8x512xf32>
    %60 = arith.addf %59, %9 : vector<8x512xf32>
    %cst_33 = arith.constant 0.000000e+00 : f32
    %61 = vector.broadcast %cst_33 : f32 to vector<8x512xf32>
    %62 = arith.maximumf %60, %61 : vector<8x512xf32>
    %c0_34 = arith.constant 0 : index
    %c0_35 = arith.constant 0 : index
    %63 = vector.load %arg6[%c0_34, %c0_35] : memref<8x512xf32, #tpu.memory_space<vmem>>, vector<8x512xf32>
    tpu.vector_store %arg6[%c0_34, %c0_35], %62 {strides = array<i32>} : memref<8x512xf32, #tpu.memory_space<vmem>>, vector<8x512xf32>,
    return
  }
}

</mosaic_0001>

<llo_original>
// kernel: tpu_custom_call.1
$region0: #{tpu_custom_call.1}
  #allocation0 [shape = 'u32[]', space=smem, size = 0x4, offset = 0x4, fixed_abs, tag = 'smem constant byte address 0x4 - core index']
  #allocation1 [shape = 'u32[144,128]{1,0:T(1,128)}', space=vmem, size = 0x12000, scoped, tag = 'internal scratch']
  #allocation2 [shape = 'f32[144,512]{1,0:T(8,128)}', space=vmem, size = 0x48000, scoped, tag = 'scratch operand']
  %s0 = inlined_call_operand.vmem [shape: f32[4,512], index: 0, kind: input, shape index: {}]
  %s1 = inlined_call_operand.vmem [shape: f32[24,4], index: 1, kind: input, shape index: {}]
  %s2 = inlined_call_operand.vmem [shape: f32[24,1], index: 2, kind: input, shape index: {}]
  %s3 = inlined_call_operand.hbm [shape: f32[8,144], index: 3, kind: input, shape index: {}]
  %s4 = inlined_call_operand.vmem [shape: f32[8,1], index: 4, kind: input, shape index: {}]
  %s5 = inlined_call_operand.vmem [shape: f32[9,512], index: 5, kind: input, shape index: {}]
  %s6 = inlined_call_operand.hbm [shape: f32[8,512], index: 6, kind: output, shape index: {}]
  %s7 = sld [smem:[#allocation0]]
  $region38: #{tpu_custom_call.1} parent=0
    _
  %s9 = ssub.s32 1, %s7
  %s10 = scalar_select 0, %s9, %s7
  $region1: #{tpu_custom_call.1} parent=0
    #allocation3 [shape = 'u8[8192]{0}', space=vmem, size = 0x2000, scoped, tag = 'input window, operand 3, single buffered']
    #allocation4 [shape = 's32[1]{0}', space=sflag, size = 0x4, scoped, tag = 'scoped memory for tpu_custom_call.1']
    #allocation5 [shape = 's32[1]{0}', space=sflag, size = 0x4, scoped, tag = 'scoped memory for tpu_custom_call.1']
    #allocation6 [shape = 'u8[16384]{0}', space=vmem, size = 0x4000, scoped, tag = 'output window, operand 0, single buffered']
    %11 = vsyncpa [#allocation4], 0
    %12 = vsyncpa [#allocation5], 0
    // Predicated region
    $region2: #{tpu_custom_call.1} parent=1 // pred_check
      _
    $region3: #{tpu_custom_call.1} parent=1 // pred_check_branch
      %14 = sbr.rel (0) target = $region5
    $region4: #{tpu_custom_call.1} parent=1 // pred_region
      _
    $region5: #{tpu_custom_call.1} parent=1 // pred_fallthru
      _
    // Predicated region
    $region6: #{tpu_custom_call.1} parent=1 // pred_check
      _
    $region7: #{tpu_custom_call.1} parent=1 // pred_check_branch
      %16 = sbr.rel (0) target = $region9
    $region8: #{tpu_custom_call.1} parent=1 // pred_region
      _
    $region9: #{tpu_custom_call.1} parent=1 // pred_fallthru
      _
    // Predicated region
    $region10: #{tpu_custom_call.1} parent=1 // pred_check
      _
    $region11: #{tpu_custom_call.1} parent=1 // pred_check_branch
      %18 = sbr.rel (0) target = $region13
    $region12: #{tpu_custom_call.1} parent=1 // pred_region
      _
    $region13: #{tpu_custom_call.1} parent=1 // pred_fallthru
      _
    // Predicated region
    $region14: #{tpu_custom_call.1} parent=1 // pred_check
      _
    $region15: #{tpu_custom_call.1} parent=1 // pred_check_branch
      %20 = sbr.rel (0) target = $region17
    $region16: #{tpu_custom_call.1} parent=1 // pred_region
      %s22 = ssub.s32 256, 256
      %23 = vsyncadd [#allocation4], %s22
      %s25 = sshll.u32 [#allocation3], 4
      %s26 = int_to_ptr.vmem [resolvable:$true] %s25
      %28 = dma.hbm_to_vmem [thread:$0]  %s3, 256, %s26, [#allocation4]
    $region17: #{tpu_custom_call.1} parent=1 // pred_fallthru
      _
    // Predicated region
    $region18: #{tpu_custom_call.1} parent=1 // pred_check
      _
    $region19: #{tpu_custom_call.1} parent=1 // pred_check_branch
      %30 = sbr.rel (0) target = $region21
    $region20: #{tpu_custom_call.1} parent=1 // pred_region
      _
    $region21: #{tpu_custom_call.1} parent=1 // pred_fallthru
      _
    // Predicated region
    $region22: #{tpu_custom_call.1} parent=1 // pred_check
      _
    $region23: #{tpu_custom_call.1} parent=1 // pred_check_branch
      %32 = sbr.rel (0) target = $region25
    $region24: #{tpu_custom_call.1} parent=1 // pred_region
      _
    $region25: #{tpu_custom_call.1} parent=1 // pred_fallthru
      _
    // Predicated region
    $region26: #{tpu_custom_call.1} parent=1 // pred_check
      _
    $region27: #{tpu_custom_call.1} parent=1 // pred_check_branch
      %34 = sbr.rel (0) target = $region29
    $region28: #{tpu_custom_call.1} parent=1 // pred_region
      %35 = dma.done [#allocation4], 256
    $region29: #{tpu_custom_call.1} parent=1 // pred_fallthru
      _
    %v36 = vld [vmem:[%s1] sm:$0xff]
    %v37 = vld [vmem:[%s1 + $0x8] sm:$0xff]
    %v38 = vld [vmem:[%s1 + $0x10] sm:$0xff]
    %v39 = vld [vmem:[%s0] sm:$0xff]
    %v40 = vld [vmem:[%s0 + $0x8] sm:$0xff]
    %v41 = vld [vmem:[%s2] sm:$0xff]
    %v42 = vld [vmem:[%s2 + $0x8] sm:$0xff]
    %v43 = vld [vmem:[%s2 + $0x10] sm:$0xff]
    %45 = vset.pattern.permute.xlu0 0
    %46 = vperm.xlu0 %45, %v41
    %v47 = vpop.permute.xlu0 %46
    %50 = vset.pattern.permute.xlu0 0
    %51 = vperm.xlu0 %50, %v42
    %v52 = vpop.permute.xlu0 %51
    %55 = vset.pattern.permute.xlu0 0
    %56 = vperm.xlu0 %55, %v43
    %v57 = vpop.permute.xlu0 %56
    %v61 = vcombine.high %v39, %v39
    %v62 = vcombine.high %v40, %v40
    %vm63 = vcmask 31744
    %v65 = vsel %vm63, %v36, 0
    %v68 = vsel %vm63, %v37, 0
    %v71 = vsel %vm63, %v38, 0
    %vm73 = vcmask 1043456
    %v74 = vsel %vm73, %v39, 0
    %v76 = vsel %vm73, %v61, 0
    %v78 = vsel %vm73, %v40, 0
    %v80 = vsel %vm73, %v62, 0
    %82 = vmatprep.subr.mxu0 %v76
    %83 = vmatpush1.msra.mxu0 %v74
    %84 = vmatprep.subr.mxu0 0.0
    %85 = vmatpush1.msra.mxu0 0.0
    %86 = vmatprep.subr.mxu0 0.0
    %87 = vmatpush1.msra.mxu0 0.0
    %88 = vmatprep.subr.mxu0 0.0
    %89 = vmatpush1.msra.mxu0 0.0
    %90 = vmatprep.subr.mxu0 0.0
    %91 = vmatpush1.msra.mxu0 0.0
    %92 = vmatprep.subr.mxu0 0.0
    %93 = vmatpush1.msra.mxu0 0.0
    %94 = vmatprep.subr.mxu0 0.0
    %95 = vmatpush1.msra.mxu0 0.0
    %96 = vmatprep.subr.mxu0 0.0
    %97 = vmatpush1.msra.mxu0 0.0
    %98 = vmatprep.subr.mxu0 0.0
    %99 = vmatpush1.msra.mxu0 0.0
    %100 = vmatprep.subr.mxu0 0.0
    %101 = vmatpush1.msra.mxu0 0.0
    %102 = vmatprep.subr.mxu0 0.0
    %103 = vmatpush1.msra.mxu0 0.0
    %104 = vmatprep.subr.mxu0 0.0
    %105 = vmatpush1.msra.mxu0 0.0
    %106 = vmatprep.subr.mxu0 0.0
    %107 = vmatpush1.msra.mxu0 0.0
    %108 = vmatprep.subr.mxu0 0.0
    %109 = vmatpush1.msra.mxu0 0.0
    %110 = vmatprep.subr.mxu0 0.0
    %111 = vmatpush1.msra.mxu0 0.0
    %112 = vmatprep.subr.mxu0 0.0
    %113 = vmatpush1.msra.mxu0 0.0
    %114 = vmatprep.subr.mxu0 0.0
    %115 = vmatpush1.msra.mxu0 0.0
    %116 = vmatprep.subr.mxu0 0.0
    %117 = vmatpush1.msra.mxu0 0.0
    %118 = vmatprep.subr.mxu0 0.0
    %119 = vmatpush1.msra.mxu0 0.0
    %120 = vmatprep.subr.mxu0 0.0
    %121 = vmatpush1.msra.mxu0 0.0
    %122 = vmatprep.subr.mxu0 0.0
    %123 = vmatpush1.msra.mxu0 0.0
    %124 = vmatprep.subr.mxu0 0.0
    %125 = vmatpush1.msra.mxu0 0.0
    %126 = vmatprep.subr.mxu0 0.0
    %127 = vmatpush1.msra.mxu0 0.0
    %128 = vmatprep.subr.mxu0 0.0
    %129 = vmatpush1.msra.mxu0 0.0
    %130 = vmatprep.subr.mxu0 0.0
    %131 = vmatpush1.msra.mxu0 0.0
    %132 = vmatprep.subr.mxu0 0.0
    %133 = vmatpush1.msra.mxu0 0.0
    %134 = vmatprep.subr.mxu0 0.0
    %135 = vmatpush1.msra.mxu0 0.0
    %136 = vmatprep.subr.mxu0 0.0
    %137 = vmatpush1.msra.mxu0 0.0
    %138 = vmatprep.subr.mxu0 0.0
    %139 = vmatpush1.msra.mxu0 0.0
    %140 = vmatprep.subr.mxu0 0.0
    %141 = vmatpush1.msra.mxu0 0.0
    %142 = vmatprep.subr.mxu0 0.0
    %143 = vmatpush1.msra.mxu0 0.0
    %144 = vmatprep.subr.mxu0 0.0
    %145 = vmatpush1.msra.mxu0 0.0
    %146 = vmatprep.mubr.f32.mxu0 0.0
    %147 = vmatmul.mubr.f32.gmra.mrb[0].mxu0 %v65
    %v148 = vpop.f32.mrb[0].mxu0
    %v149 = vadd.f32 %v47, %v148
    %v150 = vpop.f32.mrb[0].mxu0
    %v151 = vadd.f32 %v47, %v150
    %152 = vmatprep.mubr.f32.mxu0 0.0
    %153 = vmatmul.mubr.f32.gmra.mrb[0].mxu0 %v68
    %v154 = vpop.f32.mrb[0].mxu0
    %v155 = vadd.f32 %v52, %v154
    %v156 = vpop.f32.mrb[0].mxu0
    %v157 = vadd.f32 %v52, %v156
    %158 = vmatprep.mubr.f32.mxu0 0.0
    %159 = vmatmul.mubr.f32.gmra.mrb[0].mxu0 %v71
    %v160 = vpop.f32.mrb[0].mxu0
    %v161 = vadd.f32 %v57, %v160
    %v162 = vpop.f32.mrb[0].mxu0
    %v163 = vadd.f32 %v57, %v162
    %164 = vdwg.mxu0
    %165 = vmatprep.subr.mxu0 %v80
    %166 = vmatpush1.msra.mxu0 %v78
    %167 = vmatprep.subr.mxu0 0.0
    %168 = vmatpush1.msra.mxu0 0.0
    %169 = vmatprep.subr.mxu0 0.0
    %170 = vmatpush1.msra.mxu0 0.0
    %171 = vmatprep.subr.mxu0 0.0
    %172 = vmatpush1.msra.mxu0 0.0
    %173 = vmatprep.subr.mxu0 0.0
    %174 = vmatpush1.msra.mxu0 0.0
    %175 = vmatprep.subr.mxu0 0.0
    %176 = vmatpush1.msra.mxu0 0.0
    %177 = vmatprep.subr.mxu0 0.0
    %178 = vmatpush1.msra.mxu0 0.0
    %179 = vmatprep.subr.mxu0 0.0
    %180 = vmatpush1.msra.mxu0 0.0
    %181 = vmatprep.subr.mxu0 0.0
    %182 = vmatpush1.msra.mxu0 0.0
    %183 = vmatprep.subr.mxu0 0.0
    %184 = vmatpush1.msra.mxu0 0.0
    %185 = vmatprep.subr.mxu0 0.0
    %186 = vmatpush1.msra.mxu0 0.0
    %187 = vmatprep.subr.mxu0 0.0
    %188 = vmatpush1.msra.mxu0 0.0
    %189 = vmatprep.subr.mxu0 0.0
    %190 = vmatpush1.msra.mxu0 0.0
    %191 = vmatprep.subr.mxu0 0.0
    %192 = vmatpush1.msra.mxu0 0.0
    %193 = vmatprep.subr.mxu0 0.0
    %194 = vmatpush1.msra.mxu0 0.0
    %195 = vmatprep.subr.mxu0 0.0
    %196 = vmatpush1.msra.mxu0 0.0
    %197 = vmatprep.subr.mxu0 0.0
    %198 = vmatpush1.msra.mxu0 0.0
    %199 = vmatprep.subr.mxu0 0.0
    %200 = vmatpush1.msra.mxu0 0.0
    %201 = vmatprep.subr.mxu0 0.0
    %202 = vmatpush1.msra.mxu0 0.0
    %203 = vmatprep.subr.mxu0 0.0
    %204 = vmatpush1.msra.mxu0 0.0
    %205 = vmatprep.subr.mxu0 0.0
    %206 = vmatpush1.msra.mxu0 0.0
    %207 = vmatprep.subr.mxu0 0.0
    %208 = vmatpush1.msra.mxu0 0.0
    %209 = vmatprep.subr.mxu0 0.0
    %210 = vmatpush1.msra.mxu0 0.0
    %211 = vmatprep.subr.mxu0 0.0
    %212 = vmatpush1.msra.mxu0 0.0
    %213 = vmatprep.subr.mxu0 0.0
    %214 = vmatpush1.msra.mxu0 0.0
    %215 = vmatprep.subr.mxu0 0.0
    %216 = vmatpush1.msra.mxu0 0.0
    %217 = vmatprep.subr.mxu0 0.0
    %218 = vmatpush1.msra.mxu0 0.0
    %219 = vmatprep.subr.mxu0 0.0
    %220 = vmatpush1.msra.mxu0 0.0
    %221 = vmatprep.subr.mxu0 0.0
    %222 = vmatpush1.msra.mxu0 0.0
    %223 = vmatprep.subr.mxu0 0.0
    %224 = vmatpush1.msra.mxu0 0.0
    %225 = vmatprep.subr.mxu0 0.0
    %226 = vmatpush1.msra.mxu0 0.0
    %227 = vmatprep.subr.mxu0 0.0
    %228 = vmatpush1.msra.mxu0 0.0
    %229 = vmatprep.mubr.f32.mxu0 0.0
    %230 = vmatmul.mubr.f32.gmra.mrb[0].mxu0 %v65
    %v231 = vpop.f32.mrb[0].mxu0
    %v232 = vadd.f32 %v47, %v231
    %v233 = vpop.f32.mrb[0].mxu0
    %v234 = vadd.f32 %v47, %v233
    %235 = vmatprep.mubr.f32.mxu0 0.0
    %236 = vmatmul.mubr.f32.gmra.mrb[0].mxu0 %v68
    %v237 = vpop.f32.mrb[0].mxu0
    %v238 = vadd.f32 %v52, %v237
    %v239 = vpop.f32.mrb[0].mxu0
    %v240 = vadd.f32 %v52, %v239
    %241 = vmatprep.mubr.f32.mxu0 0.0
    %242 = vmatmul.mubr.f32.gmra.mrb[0].mxu0 %v71
    %v243 = vpop.f32.mrb[0].mxu0
    %v244 = vadd.f32 %v57, %v243
    %v245 = vpop.f32.mrb[0].mxu0
    %v246 = vadd.f32 %v57, %v245
    %247 = vdwg.mxu0
    %v248 = vmax.f32 %v149, 0.0
    %v249 = vmax.f32 %v151, 0.0
    %v250 = vmax.f32 %v232, 0.0
    %v251 = vmax.f32 %v234, 0.0
    %v252 = vmax.f32 %v155, 0.0
    %v253 = vmax.f32 %v157, 0.0
    %v254 = vmax.f32 %v238, 0.0
    %v255 = vmax.f32 %v240, 0.0
    %256 = vrot.lane.b32.xlu0 %v248, 17
    %v257 = vpop.permute.xlu0 %256
    %258 = vrot.lane.b32.xlu0 %v252, 17
    %v259 = vpop.permute.xlu0 %258
    %260 = vrot.lane.b32.xlu0 %v249, 17
    %v261 = vpop.permute.xlu0 %260
    %262 = vrot.lane.b32.xlu0 %v253, 17
    %v263 = vpop.permute.xlu0 %262
    %264 = vrot.lane.b32.xlu0 %v250, 17
    %v265 = vpop.permute.xlu0 %264
    %266 = vrot.lane.b32.xlu0 %v254, 17
    %v267 = vpop.permute.xlu0 %266
    %268 = vrot.lane.b32.xlu0 %v251, 17
    %v269 = vpop.permute.xlu0 %268
    %270 = vrot.lane.b32.xlu0 %v255, 17
    %v271 = vpop.permute.xlu0 %270
    %v272 = vlaneseq
    %v273 = vand.u32 %v272, 127
    %vm274 = vcmp.lt.s32.totalorder %v273, 17
    %v275 = vsel %vm274, %v265, %v269
    %v276 = vsel %vm274, %v267, %v271
    %v277 = vsel %vm274, %v261, %v265
    %v278 = vsel %vm274, %v263, %v267
    %v279 = vsel %vm274, %v257, %v261
    %v280 = vsel %vm274, %v259, %v263
    %v281 = vsel %vm274, %v269, %v257
    %v282 = vsel %vm274, %v271, %v259
    %v283 = vld [vmem:[%s5] ss:$8 sm:$0xf]
    %v285 = vlaneseq
    %v286 = vshrl.u32 %v285, 7
    %v287 = vsub.s32 0, %v286
    %v288 = vrot.slane %v283, %v287
    %v289 = vlaneseq
    %v290 = vshrl.u32 %v289, 7
    %v291 = vsub.s32 1, %v290
    %v292 = vrot.slane %v283, %v291
    %v293 = vlaneseq
    %v294 = vshrl.u32 %v293, 7
    %v295 = vsub.s32 2, %v294
    %v296 = vrot.slane %v283, %v295
    %v297 = vlaneseq
    %v298 = vshrl.u32 %v297, 7
    %v299 = vsub.s32 3, %v298
    %v300 = vrot.slane %v283, %v299
    %v305 = vmul.f32 %v281, %v288
    %v306 = vmul.f32 %v279, %v292
    %v307 = vmul.f32 %v277, %v296
    %v308 = vmul.f32 %v275, %v300
    %v309 = vmul.f32 %v282, %v288
    %v310 = vmul.f32 %v280, %v292
    %v311 = vmul.f32 %v278, %v296
    %v312 = vmul.f32 %v276, %v300
    %313 = vst [vmem:[#allocation2] sm:$0xff] %v305
    %314 = vst [vmem:[#allocation2 + $0x8] sm:$0xff] %v306
    %315 = vst [vmem:[#allocation2 + $0x10] sm:$0xff] %v307
    %316 = vst [vmem:[#allocation2 + $0x18] sm:$0xff] %v308
    %317 = vst [vmem:[#allocation2 + $0x20] sm:$0xff] %v309
    %318 = vst [vmem:[#allocation2 + $0x28] sm:$0xff] %v310
    %319 = vst [vmem:[#allocation2 + $0x30] sm:$0xff] %v311
    %320 = vst [vmem:[#allocation2 + $0x38] sm:$0xff] %v312
    %321 = vrot.lane.b32.xlu0 %v248, 16
    %v322 = vpop.permute.xlu0 %321
    %323 = vrot.lane.b32.xlu0 %v252, 16
    %v324 = vpop.permute.xlu0 %323
    %325 = vrot.lane.b32.xlu0 %v249, 16
    %v326 = vpop.permute.xlu0 %325
    %327 = vrot.lane.b32.xlu0 %v253, 16
    %v328 = vpop.permute.xlu0 %327
    %329 = vrot.lane.b32.xlu0 %v250, 16
    %v330 = vpop.permute.xlu0 %329
    %331 = vrot.lane.b32.xlu0 %v254, 16
    %v332 = vpop.permute.xlu0 %331
    %333 = vrot.lane.b32.xlu0 %v251, 16
    %v334 = vpop.permute.xlu0 %333
    %335 = vrot.lane.b32.xlu0 %v255, 16
    %v336 = vpop.permute.xlu0 %335
    %vm337 = vcmp.lt.s32.totalorder %v273, 16
    %v338 = vsel %vm337, %v330, %v334
    %v339 = vsel %vm337, %v332, %v336
    %v340 = vsel %vm337, %v326, %v330
    %v341 = vsel %vm337, %v328, %v332
    %v342 = vsel %vm337, %v322, %v326
    %v343 = vsel %vm337, %v324, %v328
    %v344 = vsel %vm337, %v334, %v322
    %v345 = vsel %vm337, %v336, %v324
    %s346 = scalar_lea.vmem %s5, 1
    %v347 = vld [vmem:[%s346] ss:$8 sm:$0xf]
    %v349 = vlaneseq
    %v350 = vshrl.u32 %v349, 7
    %v351 = vsub.s32 0, %v350
    %v352 = vrot.slane %v347, %v351
    %v353 = vlaneseq
    %v354 = vshrl.u32 %v353, 7
    %v355 = vsub.s32 1, %v354
    %v356 = vrot.slane %v347, %v355
    %v357 = vlaneseq
    %v358 = vshrl.u32 %v357, 7
    %v359 = vsub.s32 2, %v358
    %v360 = vrot.slane %v347, %v359
    %v361 = vlaneseq
    %v362 = vshrl.u32 %v361, 7
    %v363 = vsub.s32 3, %v362
    %v364 = vrot.slane %v347, %v363
    %v369 = vmul.f32 %v344, %v352
    %v370 = vmul.f32 %v342, %v356
    %v371 = vmul.f32 %v340, %v360
    %v372 = vmul.f32 %v338, %v364
    %v373 = vmul.f32 %v345, %v352
    %v374 = vmul.f32 %v343, %v356
    %v375 = vmul.f32 %v341, %v360
    %v376 = vmul.f32 %v339, %v364
    %377 = vst [vmem:[#allocation2 + $0x40] sm:$0xff] %v369
    %378 = vst [vmem:[#allocation2 + $0x48] sm:$0xff] %v370
    %379 = vst [vmem:[#allocation2 + $0x50] sm:$0xff] %v371
    %380 = vst [vmem:[#allocation2 + $0x58] sm:$0xff] %v372
    %381 = vst [vmem:[#allocation2 + $0x60] sm:$0xff] %v373
    %382 = vst [vmem:[#allocation2 + $0x68] sm:$0xff] %v374
    %383 = vst [vmem:[#allocation2 + $0x70] sm:$0xff] %v375
    %384 = vst [vmem:[#allocation2 + $0x78] sm:$0xff] %v376
    %385 = vrot.lane.b32.xlu0 %v248, 15
    %v386 = vpop.permute.xlu0 %385
    %387 = vrot.lane.b32.xlu0 %v252, 15
    %v388 = vpop.permute.xlu0 %387
    %389 = vrot.lane.b32.xlu0 %v249, 15
    %v390 = vpop.permute.xlu0 %389
    %391 = vrot.lane.b32.xlu0 %v253, 15
    %v392 = vpop.permute.xlu0 %391
    %393 = vrot.lane.b32.xlu0 %v250, 15
    %v394 = vpop.permute.xlu0 %393
    %395 = vrot.lane.b32.xlu0 %v254, 15
    %v396 = vpop.permute.xlu0 %395
    %397 = vrot.lane.b32.xlu0 %v251, 15
    %v398 = vpop.permute.xlu0 %397
    %399 = vrot.lane.b32.xlu0 %v255, 15
    %v400 = vpop.permute.xlu0 %399
    %vm401 = vcmp.lt.s32.totalorder %v273, 15
    %v402 = vsel %vm401, %v394, %v398
    %v403 = vsel %vm401, %v396, %v400
    %v404 = vsel %vm401, %v390, %v394
    %v405 = vsel %vm401, %v392, %v396
    %v406 = vsel %vm401, %v386, %v390
    %v407 = vsel %vm401, %v388, %v392
    %v408 = vsel %vm401, %v398, %v386
    %v409 = vsel %vm401, %v400, %v388
    %s410 = scalar_lea.vmem %s5, 2
    %v411 = vld [vmem:[%s410] ss:$8 sm:$0xf]
    %v413 = vlaneseq
    %v414 = vshrl.u32 %v413, 7
    %v415 = vsub.s32 0, %v414
    %v416 = vrot.slane %v411, %v415
    %v417 = vlaneseq
    %v418 = vshrl.u32 %v417, 7
    %v419 = vsub.s32 1, %v418
    %v420 = vrot.slane %v411, %v419
    %v421 = vlaneseq
    %v422 = vshrl.u32 %v421, 7
    %v423 = vsub.s32 2, %v422
    %v424 = vrot.slane %v411, %v423
    %v425 = vlaneseq
    %v426 = vshrl.u32 %v425, 7
    %v427 = vsub.s32 3, %v426
    %v428 = vrot.slane %v411, %v427
    %v433 = vmul.f32 %v408, %v416
    %v434 = vmul.f32 %v406, %v420
    %v435 = vmul.f32 %v404, %v424
    %v436 = vmul.f32 %v402, %v428
    %v437 = vmul.f32 %v409, %v416
    %v438 = vmul.f32 %v407, %v420
    %v439 = vmul.f32 %v405, %v424
    %v440 = vmul.f32 %v403, %v428
    %441 = vst [vmem:[#allocation2 + $0x80] sm:$0xff] %v433
    %442 = vst [vmem:[#allocation2 + $0x88] sm:$0xff] %v434
    %443 = vst [vmem:[#allocation2 + $0x90] sm:$0xff] %v435
    %444 = vst [vmem:[#allocation2 + $0x98] sm:$0xff] %v436
    %445 = vst [vmem:[#allocation2 + $0xa0] sm:$0xff] %v437
    %446 = vst [vmem:[#allocation2 + $0xa8] sm:$0xff] %v438
    %447 = vst [vmem:[#allocation2 + $0xb0] sm:$0xff] %v439
    %448 = vst [vmem:[#allocation2 + $0xb8] sm:$0xff] %v440
    %449 = vrot.lane.b32.xlu0 %v248, 1
    %v450 = vpop.permute.xlu0 %449
    %451 = vrot.lane.b32.xlu0 %v252, 1
    %v452 = vpop.permute.xlu0 %451
    %453 = vrot.lane.b32.xlu0 %v249, 1
    %v454 = vpop.permute.xlu0 %453
    %455 = vrot.lane.b32.xlu0 %v253, 1
    %v456 = vpop.permute.xlu0 %455
    %457 = vrot.lane.b32.xlu0 %v250, 1
    %v458 = vpop.permute.xlu0 %457
    %459 = vrot.lane.b32.xlu0 %v254, 1
    %v460 = vpop.permute.xlu0 %459
    %461 = vrot.lane.b32.xlu0 %v251, 1
    %v462 = vpop.permute.xlu0 %461
    %463 = vrot.lane.b32.xlu0 %v255, 1
    %v464 = vpop.permute.xlu0 %463
    %vm465 = vcmp.lt.s32.totalorder %v273, 1
    %v466 = vsel %vm465, %v458, %v462
    %v467 = vsel %vm465, %v460, %v464
    %v468 = vsel %vm465, %v454, %v458
    %v469 = vsel %vm465, %v456, %v460
    %v470 = vsel %vm465, %v450, %v454
    %v471 = vsel %vm465, %v452, %v456
    %v472 = vsel %vm465, %v462, %v450
    %v473 = vsel %vm465, %v464, %v452
    %s474 = scalar_lea.vmem %s5, 3
    %v475 = vld [vmem:[%s474] ss:$8 sm:$0xf]
    %v477 = vlaneseq
    %v478 = vshrl.u32 %v477, 7
    %v479 = vsub.s32 0, %v478
    %v480 = vrot.slane %v475, %v479
    %v481 = vlaneseq
    %v482 = vshrl.u32 %v481, 7
    %v483 = vsub.s32 1, %v482
    %v484 = vrot.slane %v475, %v483
    %v485 = vlaneseq
    %v486 = vshrl.u32 %v485, 7
    %v487 = vsub.s32 2, %v486
    %v488 = vrot.slane %v475, %v487
    %v489 = vlaneseq
    %v490 = vshrl.u32 %v489, 7
    %v491 = vsub.s32 3, %v490
    %v492 = vrot.slane %v475, %v491
    %v497 = vmul.f32 %v472, %v480
    %v498 = vmul.f32 %v470, %v484
    %v499 = vmul.f32 %v468, %v488
    %v500 = vmul.f32 %v466, %v492
    %v501 = vmul.f32 %v473, %v480
    %v502 = vmul.f32 %v471, %v484
    %v503 = vmul.f32 %v469, %v488
    %v504 = vmul.f32 %v467, %v492
    %505 = vst [vmem:[#allocation2 + $0xc0] sm:$0xff] %v497
    %506 = vst [vmem:[#allocation2 + $0xc8] sm:$0xff] %v498
    %507 = vst [vmem:[#allocation2 + $0xd0] sm:$0xff] %v499
    %508 = vst [vmem:[#allocation2 + $0xd8] sm:$0xff] %v500
    %509 = vst [vmem:[#allocation2 + $0xe0] sm:$0xff] %v501
    %510 = vst [vmem:[#allocation2 + $0xe8] sm:$0xff] %v502
    %511 = vst [vmem:[#allocation2 + $0xf0] sm:$0xff] %v503
    %512 = vst [vmem:[#allocation2 + $0xf8] sm:$0xff] %v504
    %s513 = scalar_lea.vmem %s5, 4
    %v514 = vld [vmem:[%s513] ss:$8 sm:$0xf]
    %v516 = vlaneseq
    %v517 = vshrl.u32 %v516, 7
    %v518 = vsub.s32 0, %v517
    %v519 = vrot.slane %v514, %v518
    %v520 = vlaneseq
    %v521 = vshrl.u32 %v520, 7
    %v522 = vsub.s32 1, %v521
    %v523 = vrot.slane %v514, %v522
    %v524 = vlaneseq
    %v525 = vshrl.u32 %v524, 7
    %v526 = vsub.s32 2, %v525
    %v527 = vrot.slane %v514, %v526
    %v528 = vlaneseq
    %v529 = vshrl.u32 %v528, 7
    %v530 = vsub.s32 3, %v529
    %v531 = vrot.slane %v514, %v530
    %v536 = vmul.f32 %v248, %v519
    %v537 = vmul.f32 %v249, %v523
    %v538 = vmul.f32 %v250, %v527
    %v539 = vmul.f32 %v251, %v531
    %v540 = vmul.f32 %v252, %v519
    %v541 = vmul.f32 %v253, %v523
    %v542 = vmul.f32 %v254, %v527
    %v543 = vmul.f32 %v255, %v531
    %544 = vst [vmem:[#allocation2 + $0x100] sm:$0xff] %v536
    %545 = vst [vmem:[#allocation2 + $0x108] sm:$0xff] %v537
    %546 = vst [vmem:[#allocation2 + $0x110] sm:$0xff] %v538
    %547 = vst [vmem:[#allocation2 + $0x118] sm:$0xff] %v539
    %548 = vst [vmem:[#allocation2 + $0x120] sm:$0xff] %v540
    %549 = vst [vmem:[#allocation2 + $0x128] sm:$0xff] %v541
    %550 = vst [vmem:[#allocation2 + $0x130] sm:$0xff] %v542
    %551 = vst [vmem:[#allocation2 + $0x138] sm:$0xff] %v543
    %552 = vrot.lane.b32.xlu0 %v248, 127
    %v553 = vpop.permute.xlu0 %552
    %554 = vrot.lane.b32.xlu0 %v252, 127
    %v555 = vpop.permute.xlu0 %554
    %556 = vrot.lane.b32.xlu0 %v249, 127
    %v557 = vpop.permute.xlu0 %556
    %558 = vrot.lane.b32.xlu0 %v253, 127
    %v559 = vpop.permute.xlu0 %558
    %560 = vrot.lane.b32.xlu0 %v250, 127
    %v561 = vpop.permute.xlu0 %560
    %562 = vrot.lane.b32.xlu0 %v254, 127
    %v563 = vpop.permute.xlu0 %562
    %564 = vrot.lane.b32.xlu0 %v251, 127
    %v565 = vpop.permute.xlu0 %564
    %566 = vrot.lane.b32.xlu0 %v255, 127
    %v567 = vpop.permute.xlu0 %566
    %vm568 = vcmp.lt.s32.totalorder %v273, 127
    %v569 = vsel %vm568, %v561, %v565
    %v570 = vsel %vm568, %v563, %v567
    %v571 = vsel %vm568, %v557, %v561
    %v572 = vsel %vm568, %v559, %v563
    %v573 = vsel %vm568, %v553, %v557
    %v574 = vsel %vm568, %v555, %v559
    %v575 = vsel %vm568, %v565, %v553
    %v576 = vsel %vm568, %v567, %v555
    %s577 = scalar_lea.vmem %s5, 5
    %v578 = vld [vmem:[%s577] ss:$8 sm:$0xf]
    %v580 = vlaneseq
    %v581 = vshrl.u32 %v580, 7
    %v582 = vsub.s32 0, %v581
    %v583 = vrot.slane %v578, %v582
    %v584 = vlaneseq
    %v585 = vshrl.u32 %v584, 7
    %v586 = vsub.s32 1, %v585
    %v587 = vrot.slane %v578, %v586
    %v588 = vlaneseq
    %v589 = vshrl.u32 %v588, 7
    %v590 = vsub.s32 2, %v589
    %v591 = vrot.slane %v578, %v590
    %v592 = vlaneseq
    %v593 = vshrl.u32 %v592, 7
    %v594 = vsub.s32 3, %v593
    %v595 = vrot.slane %v578, %v594
    %v600 = vmul.f32 %v573, %v583
    %v601 = vmul.f32 %v571, %v587
    %v602 = vmul.f32 %v569, %v591
    %v603 = vmul.f32 %v575, %v595
    %v604 = vmul.f32 %v574, %v583
    %v605 = vmul.f32 %v572, %v587
    %v606 = vmul.f32 %v570, %v591
    %v607 = vmul.f32 %v576, %v595
    %608 = vst [vmem:[#allocation2 + $0x140] sm:$0xff] %v600
    %609 = vst [vmem:[#allocation2 + $0x148] sm:$0xff] %v601
    %610 = vst [vmem:[#allocation2 + $0x150] sm:$0xff] %v602
    %611 = vst [vmem:[#allocation2 + $0x158] sm:$0xff] %v603
    %612 = vst [vmem:[#allocation2 + $0x160] sm:$0xff] %v604
    %613 = vst [vmem:[#allocation2 + $0x168] sm:$0xff] %v605
    %614 = vst [vmem:[#allocation2 + $0x170] sm:$0xff] %v606
    %615 = vst [vmem:[#allocation2 + $0x178] sm:$0xff] %v607
    %616 = vrot.lane.b32.xlu0 %v248, 113
    %v617 = vpop.permute.xlu0 %616
    %618 = vrot.lane.b32.xlu0 %v252, 113
    %v619 = vpop.permute.xlu0 %618
    %620 = vrot.lane.b32.xlu0 %v249, 113
    %v621 = vpop.permute.xlu0 %620
    %622 = vrot.lane.b32.xlu0 %v253, 113
    %v623 = vpop.permute.xlu0 %622
    %624 = vrot.lane.b32.xlu0 %v250, 113
    %v625 = vpop.permute.xlu0 %624
    %626 = vrot.lane.b32.xlu0 %v254, 113
    %v627 = vpop.permute.xlu0 %626
    %628 = vrot.lane.b32.xlu0 %v251, 113
    %v629 = vpop.permute.xlu0 %628
    %630 = vrot.lane.b32.xlu0 %v255, 113
    %v631 = vpop.permute.xlu0 %630
    %vm632 = vcmp.lt.s32.totalorder %v273, 113
    %v633 = vsel %vm632, %v625, %v629
    %v634 = vsel %vm632, %v627, %v631
    %v635 = vsel %vm632, %v621, %v625
    %v636 = vsel %vm632, %v623, %v627
    %v637 = vsel %vm632, %v617, %v621
    %v638 = vsel %vm632, %v619, %v623
    %v639 = vsel %vm632, %v629, %v617
    %v640 = vsel %vm632, %v631, %v619
    %s641 = scalar_lea.vmem %s5, 6
    %v642 = vld [vmem:[%s641] ss:$8 sm:$0xf]
    %v644 = vlaneseq
    %v645 = vshrl.u32 %v644, 7
    %v646 = vsub.s32 0, %v645
    %v647 = vrot.slane %v642, %v646
    %v648 = vlaneseq
    %v649 = vshrl.u32 %v648, 7
    %v650 = vsub.s32 1, %v649
    %v651 = vrot.slane %v642, %v650
    %v652 = vlaneseq
    %v653 = vshrl.u32 %v652, 7
    %v654 = vsub.s32 2, %v653
    %v655 = vrot.slane %v642, %v654
    %v656 = vlaneseq
    %v657 = vshrl.u32 %v656, 7
    %v658 = vsub.s32 3, %v657
    %v659 = vrot.slane %v642, %v658
    %v664 = vmul.f32 %v637, %v647
    %v665 = vmul.f32 %v635, %v651
    %v666 = vmul.f32 %v633, %v655
    %v667 = vmul.f32 %v639, %v659
    %v668 = vmul.f32 %v638, %v647
    %v669 = vmul.f32 %v636, %v651
    %v670 = vmul.f32 %v634, %v655
    %v671 = vmul.f32 %v640, %v659
    %672 = vst [vmem:[#allocation2 + $0x180] sm:$0xff] %v664
    %673 = vst [vmem:[#allocation2 + $0x188] sm:$0xff] %v665
    %674 = vst [vmem:[#allocation2 + $0x190] sm:$0xff] %v666
    %675 = vst [vmem:[#allocation2 + $0x198] sm:$0xff] %v667
    %676 = vst [vmem:[#allocation2 + $0x1a0] sm:$0xff] %v668
    %677 = vst [vmem:[#allocation2 + $0x1a8] sm:$0xff] %v669
    %678 = vst [vmem:[#allocation2 + $0x1b0] sm:$0xff] %v670
    %679 = vst [vmem:[#allocation2 + $0x1b8] sm:$0xff] %v671
    %680 = vrot.lane.b32.xlu0 %v248, 112
    %v681 = vpop.permute.xlu0 %680
    %682 = vrot.lane.b32.xlu0 %v252, 112
    %v683 = vpop.permute.xlu0 %682
    %684 = vrot.lane.b32.xlu0 %v249, 112
    %v685 = vpop.permute.xlu0 %684
    %686 = vrot.lane.b32.xlu0 %v253, 112
    %v687 = vpop.permute.xlu0 %686
    %688 = vrot.lane.b32.xlu0 %v250, 112
    %v689 = vpop.permute.xlu0 %688
    %690 = vrot.lane.b32.xlu0 %v254, 112
    %v691 = vpop.permute.xlu0 %690
    %692 = vrot.lane.b32.xlu0 %v251, 112
    %v693 = vpop.permute.xlu0 %692
    %694 = vrot.lane.b32.xlu0 %v255, 112
    %v695 = vpop.permute.xlu0 %694
    %vm696 = vcmp.lt.s32.totalorder %v273, 112
    %v697 = vsel %vm696, %v689, %v693
    %v698 = vsel %vm696, %v691, %v695
    %v699 = vsel %vm696, %v685, %v689
    %v700 = vsel %vm696, %v687, %v691
    %v701 = vsel %vm696, %v681, %v685
    %v702 = vsel %vm696, %v683, %v687
    %v703 = vsel %vm696, %v693, %v681
    %v704 = vsel %vm696, %v695, %v683
    %s705 = scalar_lea.vmem %s5, 7
    %v706 = vld [vmem:[%s705] ss:$8 sm:$0xf]
    %v708 = vlaneseq
    %v709 = vshrl.u32 %v708, 7
    %v710 = vsub.s32 0, %v709
    %v711 = vrot.slane %v706, %v710
    %v712 = vlaneseq
    %v713 = vshrl.u32 %v712, 7
    %v714 = vsub.s32 1, %v713
    %v715 = vrot.slane %v706, %v714
    %v716 = vlaneseq
    %v717 = vshrl.u32 %v716, 7
    %v718 = vsub.s32 2, %v717
    %v719 = vrot.slane %v706, %v718
    %v720 = vlaneseq
    %v721 = vshrl.u32 %v720, 7
    %v722 = vsub.s32 3, %v721
    %v723 = vrot.slane %v706, %v722
    %v728 = vmul.f32 %v701, %v711
    %v729 = vmul.f32 %v699, %v715
    %v730 = vmul.f32 %v697, %v719
    %v731 = vmul.f32 %v703, %v723
    %v732 = vmul.f32 %v702, %v711
    %v733 = vmul.f32 %v700, %v715
    %v734 = vmul.f32 %v698, %v719
    %v735 = vmul.f32 %v704, %v723
    %736 = vst [vmem:[#allocation2 + $0x1c0] sm:$0xff] %v728
    %737 = vst [vmem:[#allocation2 + $0x1c8] sm:$0xff] %v729
    %738 = vst [vmem:[#allocation2 + $0x1d0] sm:$0xff] %v730
    %739 = vst [vmem:[#allocation2 + $0x1d8] sm:$0xff] %v731
    %740 = vst [vmem:[#allocation2 + $0x1e0] sm:$0xff] %v732
    %741 = vst [vmem:[#allocation2 + $0x1e8] sm:$0xff] %v733
    %742 = vst [vmem:[#allocation2 + $0x1f0] sm:$0xff] %v734
    %743 = vst [vmem:[#allocation2 + $0x1f8] sm:$0xff] %v735
    %744 = vrot.lane.b32.xlu0 %v248, 111
    %v745 = vpop.permute.xlu0 %744
    %746 = vrot.lane.b32.xlu0 %v252, 111
    %v747 = vpop.permute.xlu0 %746
    %748 = vrot.lane.b32.xlu0 %v249, 111
    %v749 = vpop.permute.xlu0 %748
    %750 = vrot.lane.b32.xlu0 %v253, 111
    %v751 = vpop.permute.xlu0 %750
    %752 = vrot.lane.b32.xlu0 %v250, 111
    %v753 = vpop.permute.xlu0 %752
    %754 = vrot.lane.b32.xlu0 %v254, 111
    %v755 = vpop.permute.xlu0 %754
    %756 = vrot.lane.b32.xlu0 %v251, 111
    %v757 = vpop.permute.xlu0 %756
    %758 = vrot.lane.b32.xlu0 %v255, 111
    %v759 = vpop.permute.xlu0 %758
    %vm760 = vcmp.lt.s32.totalorder %v273, 111
    %v761 = vsel %vm760, %v753, %v757
    %v762 = vsel %vm760, %v755, %v759
    %v763 = vsel %vm760, %v749, %v753
    %v764 = vsel %vm760, %v751, %v755
    %v765 = vsel %vm760, %v745, %v749
    %v766 = vsel %vm760, %v747, %v751
    %v767 = vsel %vm760, %v757, %v745
    %v768 = vsel %vm760, %v759, %v747
    %s769 = scalar_lea.vmem %s5, 32
    %v770 = vld [vmem:[%s769] ss:$8 sm:$0xf]
    %v772 = vlaneseq
    %v773 = vshrl.u32 %v772, 7
    %v774 = vsub.s32 0, %v773
    %v775 = vrot.slane %v770, %v774
    %v776 = vlaneseq
    %v777 = vshrl.u32 %v776, 7
    %v778 = vsub.s32 1, %v777
    %v779 = vrot.slane %v770, %v778
    %v780 = vlaneseq
    %v781 = vshrl.u32 %v780, 7
    %v782 = vsub.s32 2, %v781
    %v783 = vrot.slane %v770, %v782
    %v784 = vlaneseq
    %v785 = vshrl.u32 %v784, 7
    %v786 = vsub.s32 3, %v785
    %v787 = vrot.slane %v770, %v786
    %v792 = vmul.f32 %v765, %v775
    %v793 = vmul.f32 %v763, %v779
    %v794 = vmul.f32 %v761, %v783
    %v795 = vmul.f32 %v767, %v787
    %v796 = vmul.f32 %v766, %v775
    %v797 = vmul.f32 %v764, %v779
    %v798 = vmul.f32 %v762, %v783
    %v799 = vmul.f32 %v768, %v787
    %800 = vst [vmem:[#allocation2 + $0x200] sm:$0xff] %v792
    %801 = vst [vmem:[#allocation2 + $0x208] sm:$0xff] %v793
    %802 = vst [vmem:[#allocation2 + $0x210] sm:$0xff] %v794
    %803 = vst [vmem:[#allocation2 + $0x218] sm:$0xff] %v795
    %804 = vst [vmem:[#allocation2 + $0x220] sm:$0xff] %v796
    %805 = vst [vmem:[#allocation2 + $0x228] sm:$0xff] %v797
    %806 = vst [vmem:[#allocation2 + $0x230] sm:$0xff] %v798
    %807 = vst [vmem:[#allocation2 + $0x238] sm:$0xff] %v799
    %v808 = vld [vmem:[#allocation3] sm:$0xff]
    %v809 = vld [vmem:[#allocation3 + $0x8] sm:$0xff]
    %v810 = vld [vmem:[#allocation2] sm:$0xff]
    %v811 = vld [vmem:[#allocation2 + $0x8] sm:$0xff]
    %v812 = vld [vmem:[#allocation2 + $0x10] sm:$0xff]
    %v813 = vld [vmem:[#allocation2 + $0x18] sm:$0xff]
    %v814 = vld [vmem:[#allocation2 + $0x20] sm:$0xff]
    %v815 = vld [vmem:[#allocation2 + $0x28] sm:$0xff]
    %v816 = vld [vmem:[#allocation2 + $0x30] sm:$0xff]
    %v817 = vld [vmem:[#allocation2 + $0x38] sm:$0xff]
    %v818 = vld [vmem:[#allocation2 + $0x40] sm:$0xff]
    %v819 = vld [vmem:[#allocation2 + $0x48] sm:$0xff]
    %v820 = vld [vmem:[#allocation2 + $0x50] sm:$0xff]
    %v821 = vld [vmem:[#allocation2 + $0x58] sm:$0xff]
    %v822 = vld [vmem:[#allocation2 + $0x60] sm:$0xff]
    %v823 = vld [vmem:[#allocation2 + $0x68] sm:$0xff]
    %v824 = vld [vmem:[#allocation2 + $0x70] sm:$0xff]
    %v825 = vld [vmem:[#allocation2 + $0x78] sm:$0xff]
    %v826 = vld [vmem:[#allocation2 + $0x80] sm:$0xff]
    %v827 = vld [vmem:[#allocation2 + $0x88] sm:$0xff]
    %v828 = vld [vmem:[#allocation2 + $0x90] sm:$0xff]
    %v829 = vld [vmem:[#allocation2 + $0x98] sm:$0xff]
    %v830 = vld [vmem:[#allocation2 + $0xa0] sm:$0xff]
    %v831 = vld [vmem:[#allocation2 + $0xa8] sm:$0xff]
    %v832 = vld [vmem:[#allocation2 + $0xb0] sm:$0xff]
    %v833 = vld [vmem:[#allocation2 + $0xb8] sm:$0xff]
    %v834 = vld [vmem:[#allocation2 + $0xc0] sm:$0xff]
    %v835 = vld [vmem:[#allocation2 + $0xc8] sm:$0xff]
    %v836 = vld [vmem:[#allocation2 + $0xd0] sm:$0xff]
    %v837 = vld [vmem:[#allocation2 + $0xd8] sm:$0xff]
    %v838 = vld [vmem:[#allocation2 + $0xe0] sm:$0xff]
    %v839 = vld [vmem:[#allocation2 + $0xe8] sm:$0xff]
    %v840 = vld [vmem:[#allocation2 + $0xf0] sm:$0xff]
    %v841 = vld [vmem:[#allocation2 + $0xf8] sm:$0xff]
    %v842 = vld [vmem:[#allocation2 + $0x100] sm:$0xff]
    %v843 = vld [vmem:[#allocation2 + $0x108] sm:$0xff]
    %v844 = vld [vmem:[#allocation2 + $0x110] sm:$0xff]
    %v845 = vld [vmem:[#allocation2 + $0x118] sm:$0xff]
    %v846 = vld [vmem:[#allocation2 + $0x120] sm:$0xff]
    %v847 = vld [vmem:[#allocation2 + $0x128] sm:$0xff]
    %v848 = vld [vmem:[#allocation2 + $0x130] sm:$0xff]
    %v849 = vld [vmem:[#allocation2 + $0x138] sm:$0xff]
    %v850 = vld [vmem:[#allocation2 + $0x140] sm:$0xff]
    %v851 = vld [vmem:[#allocation2 + $0x148] sm:$0xff]
    %v852 = vld [vmem:[#allocation2 + $0x150] sm:$0xff]
    %v853 = vld [vmem:[#allocation2 + $0x158] sm:$0xff]
    %v854 = vld [vmem:[#allocation2 + $0x160] sm:$0xff]
    %v855 = vld [vmem:[#allocation2 + $0x168] sm:$0xff]
    %v856 = vld [vmem:[#allocation2 + $0x170] sm:$0xff]
    %v857 = vld [vmem:[#allocation2 + $0x178] sm:$0xff]
    %v858 = vld [vmem:[#allocation2 + $0x180] sm:$0xff]
    %v859 = vld [vmem:[#allocation2 + $0x188] sm:$0xff]
    %v860 = vld [vmem:[#allocation2 + $0x190] sm:$0xff]
    %v861 = vld [vmem:[#allocation2 + $0x198] sm:$0xff]
    %v862 = vld [vmem:[#allocation2 + $0x1a0] sm:$0xff]
    %v863 = vld [vmem:[#allocation2 + $0x1a8] sm:$0xff]
    %v864 = vld [vmem:[#allocation2 + $0x1b0] sm:$0xff]
    %v865 = vld [vmem:[#allocation2 + $0x1b8] sm:$0xff]
    %v866 = vld [vmem:[#allocation2 + $0x1c0] sm:$0xff]
    %v867 = vld [vmem:[#allocation2 + $0x1c8] sm:$0xff]
    %v868 = vld [vmem:[#allocation2 + $0x1d0] sm:$0xff]
    %v869 = vld [vmem:[#allocation2 + $0x1d8] sm:$0xff]
    %v870 = vld [vmem:[#allocation2 + $0x1e0] sm:$0xff]
    %v871 = vld [vmem:[#allocation2 + $0x1e8] sm:$0xff]
    %v872 = vld [vmem:[#allocation2 + $0x1f0] sm:$0xff]
    %v873 = vld [vmem:[#allocation2 + $0x1f8] sm:$0xff]
    %v874 = vld [vmem:[#allocation2 + $0x200] sm:$0xff]
    %v875 = vld [vmem:[#allocation2 + $0x208] sm:$0xff]
    %v876 = vld [vmem:[#allocation2 + $0x210] sm:$0xff]
    %v877 = vld [vmem:[#allocation2 + $0x218] sm:$0xff]
    %v878 = vld [vmem:[#allocation2 + $0x220] sm:$0xff]
    %v879 = vld [vmem:[#allocation2 + $0x228] sm:$0xff]
    %v880 = vld [vmem:[#allocation2 + $0x230] sm:$0xff]
    %v881 = vld [vmem:[#allocation2 + $0x238] sm:$0xff]
    %v882 = vld [vmem:[%s4] sm:$0xff]
    %884 = vset.pattern.permute.xlu0 0
    %885 = vperm.xlu0 %884, %v882
    %v886 = vpop.permute.xlu0 %885
    %vm888 = vcmask 130048
    %v890 = vsel %vm888, %v809, 0
    %892 = vmatprep.subr.mxu0 %v811
    %893 = vmatpush1.msra.mxu0 %v810
    %894 = vmatprep.subr.mxu0 %v815
    %895 = vmatpush1.msra.mxu0 %v814
    %896 = vmatprep.subr.mxu0 %v819
    %897 = vmatpush1.msra.mxu0 %v818
    %898 = vmatprep.subr.mxu0 %v823
    %899 = vmatpush1.msra.mxu0 %v822
    %900 = vmatprep.subr.mxu0 %v827
    %901 = vmatpush1.msra.mxu0 %v826
    %902 = vmatprep.subr.mxu0 %v831
    %903 = vmatpush1.msra.mxu0 %v830
    %904 = vmatprep.subr.mxu0 %v835
    %905 = vmatpush1.msra.mxu0 %v834
    %906 = vmatprep.subr.mxu0 %v839
    %907 = vmatpush1.msra.mxu0 %v838
    %908 = vmatprep.subr.mxu0 %v843
    %909 = vmatpush1.msra.mxu0 %v842
    %910 = vmatprep.subr.mxu0 %v847
    %911 = vmatpush1.msra.mxu0 %v846
    %912 = vmatprep.subr.mxu0 %v851
    %913 = vmatpush1.msra.mxu0 %v850
    %914 = vmatprep.subr.mxu0 %v855
    %915 = vmatpush1.msra.mxu0 %v854
    %916 = vmatprep.subr.mxu0 %v859
    %917 = vmatpush1.msra.mxu0 %v858
    %918 = vmatprep.subr.mxu0 %v863
    %919 = vmatpush1.msra.mxu0 %v862
    %920 = vmatprep.subr.mxu0 %v867
    %921 = vmatpush1.msra.mxu0 %v866
    %922 = vmatprep.subr.mxu0 %v871
    %923 = vmatpush1.msra.mxu0 %v870
    %924 = vmatprep.subr.mxu0 %v875
    %925 = vmatpush1.msra.mxu0 %v874
    %926 = vmatprep.subr.mxu0 %v879
    %927 = vmatpush1.msra.mxu0 %v878
    %928 = vmatprep.subr.mxu0 0.0
    %929 = vmatpush1.msra.mxu0 0.0
    %930 = vmatprep.subr.mxu0 0.0
    %931 = vmatpush1.msra.mxu0 0.0
    %932 = vmatprep.subr.mxu0 0.0
    %933 = vmatpush1.msra.mxu0 0.0
    %934 = vmatprep.subr.mxu0 0.0
    %935 = vmatpush1.msra.mxu0 0.0
    %936 = vmatprep.subr.mxu0 0.0
    %937 = vmatpush1.msra.mxu0 0.0
    %938 = vmatprep.subr.mxu0 0.0
    %939 = vmatpush1.msra.mxu0 0.0
    %940 = vmatprep.subr.mxu0 0.0
    %941 = vmatpush1.msra.mxu0 0.0
    %942 = vmatprep.subr.mxu0 0.0
    %943 = vmatpush1.msra.mxu0 0.0
    %944 = vmatprep.subr.mxu0 0.0
    %945 = vmatpush1.msra.mxu0 0.0
    %946 = vmatprep.subr.mxu0 0.0
    %947 = vmatpush1.msra.mxu0 0.0
    %948 = vmatprep.subr.mxu0 0.0
    %949 = vmatpush1.msra.mxu0 0.0
    %950 = vmatprep.subr.mxu0 0.0
    %951 = vmatpush1.msra.mxu0 0.0
    %952 = vmatprep.subr.mxu0 0.0
    %953 = vmatpush1.msra.mxu0 0.0
    %954 = vmatprep.subr.mxu0 0.0
    %955 = vmatpush1.msra.mxu0 0.0
    %956 = vmatprep.mubr.f32.mxu0 %v890
    %957 = vmatmul.mubr.f32.gmra.mrb[0].mxu0 %v808
    %v958 = vpop.f32.mrb[0].mxu0
    %v959 = vadd.f32 %v886, %v958
    %v960 = vpop.f32.mrb[0].mxu0
    %v961 = vadd.f32 %v886, %v960
    %962 = vdwg.mxu0
    %963 = vmatprep.subr.mxu0 %v813
    %964 = vmatpush1.msra.mxu0 %v812
    %965 = vmatprep.subr.mxu0 %v817
    %966 = vmatpush1.msra.mxu0 %v816
    %967 = vmatprep.subr.mxu0 %v821
    %968 = vmatpush1.msra.mxu0 %v820
    %969 = vmatprep.subr.mxu0 %v825
    %970 = vmatpush1.msra.mxu0 %v824
    %971 = vmatprep.subr.mxu0 %v829
    %972 = vmatpush1.msra.mxu0 %v828
    %973 = vmatprep.subr.mxu0 %v833
    %974 = vmatpush1.msra.mxu0 %v832
    %975 = vmatprep.subr.mxu0 %v837
    %976 = vmatpush1.msra.mxu0 %v836
    %977 = vmatprep.subr.mxu0 %v841
    %978 = vmatpush1.msra.mxu0 %v840
    %979 = vmatprep.subr.mxu0 %v845
    %980 = vmatpush1.msra.mxu0 %v844
    %981 = vmatprep.subr.mxu0 %v849
    %982 = vmatpush1.msra.mxu0 %v848
    %983 = vmatprep.subr.mxu0 %v853
    %984 = vmatpush1.msra.mxu0 %v852
    %985 = vmatprep.subr.mxu0 %v857
    %986 = vmatpush1.msra.mxu0 %v856
    %987 = vmatprep.subr.mxu0 %v861
    %988 = vmatpush1.msra.mxu0 %v860
    %989 = vmatprep.subr.mxu0 %v865
    %990 = vmatpush1.msra.mxu0 %v864
    %991 = vmatprep.subr.mxu0 %v869
    %992 = vmatpush1.msra.mxu0 %v868
    %993 = vmatprep.subr.mxu0 %v873
    %994 = vmatpush1.msra.mxu0 %v872
    %995 = vmatprep.subr.mxu0 %v877
    %996 = vmatpush1.msra.mxu0 %v876
    %997 = vmatprep.subr.mxu0 %v881
    %998 = vmatpush1.msra.mxu0 %v880
    %999 = vmatprep.subr.mxu0 0.0
    %1000 = vmatpush1.msra.mxu0 0.0
    %1001 = vmatprep.subr.mxu0 0.0
    %1002 = vmatpush1.msra.mxu0 0.0
    %1003 = vmatprep.subr.mxu0 0.0
    %1004 = vmatpush1.msra.mxu0 0.0
    %1005 = vmatprep.subr.mxu0 0.0
    %1006 = vmatpush1.msra.mxu0 0.0
    %1007 = vmatprep.subr.mxu0 0.0
    %1008 = vmatpush1.msra.mxu0 0.0
    %1009 = vmatprep.subr.mxu0 0.0
    %1010 = vmatpush1.msra.mxu0 0.0
    %1011 = vmatprep.subr.mxu0 0.0
    %1012 = vmatpush1.msra.mxu0 0.0
    %1013 = vmatprep.subr.mxu0 0.0
    %1014 = vmatpush1.msra.mxu0 0.0
    %1015 = vmatprep.subr.mxu0 0.0
    %1016 = vmatpush1.msra.mxu0 0.0
    %1017 = vmatprep.subr.mxu0 0.0
    %1018 = vmatpush1.msra.mxu0 0.0
    %1019 = vmatprep.subr.mxu0 0.0
    %1020 = vmatpush1.msra.mxu0 0.0
    %1021 = vmatprep.subr.mxu0 0.0
    %1022 = vmatpush1.msra.mxu0 0.0
    %1023 = vmatprep.subr.mxu0 0.0
    %1024 = vmatpush1.msra.mxu0 0.0
    %1025 = vmatprep.subr.mxu0 0.0
    %1026 = vmatpush1.msra.mxu0 0.0
    %1027 = vmatprep.mubr.f32.mxu0 %v890
    %1028 = vmatmul.mubr.f32.gmra.mrb[0].mxu0 %v808
    %v1029 = vpop.f32.mrb[0].mxu0
    %v1030 = vadd.f32 %v886, %v1029
    %v1031 = vpop.f32.mrb[0].mxu0
    %v1032 = vadd.f32 %v886, %v1031
    %1033 = vdwg.mxu0
    %v1034 = vadd.f32 %v959, %v161
    %v1035 = vadd.f32 %v961, %v163
    %v1036 = vadd.f32 %v1030, %v244
    %v1037 = vadd.f32 %v1032, %v246
    %v1038 = vmax.f32 %v1034, 0.0
    %v1039 = vmax.f32 %v1035, 0.0
    %v1040 = vmax.f32 %v1036, 0.0
    %v1041 = vmax.f32 %v1037, 0.0
    %1042 = vst [vmem:[#allocation6] sm:$0xff] %v1038
    %1043 = vst [vmem:[#allocation6 + $0x8] sm:$0xff] %v1039
    %1044 = vst [vmem:[#allocation6 + $0x10] sm:$0xff] %v1040
    %1045 = vst [vmem:[#allocation6 + $0x18] sm:$0xff] %v1041
    // Predicated region
    $region30: #{tpu_custom_call.1} parent=1 // pred_check
      _
    $region31: #{tpu_custom_call.1} parent=1 // pred_check_branch
      %1047 = sbr.rel (0) target = $region33
    $region32: #{tpu_custom_call.1} parent=1 // pred_region
      %s1049 = ssub.s32 512, 512
      %1050 = vsyncadd [#allocation5], %s1049
      %s1052 = sshll.u32 [#allocation6], 4
      %s1053 = int_to_ptr.vmem [resolvable:$true] %s1052
      %1055 = dma.vmem_to_hbm [thread:$0]  %s1053, 512, %s6, [#allocation5]
    $region33: #{tpu_custom_call.1} parent=1 // pred_fallthru
      _
    // Predicated region
    $region34: #{tpu_custom_call.1} parent=1 // pred_check
      _
    $region35: #{tpu_custom_call.1} parent=1 // pred_check_branch
      %1057 = sbr.rel (0) target = $region37
    $region36: #{tpu_custom_call.1} parent=1 // pred_region
      %1058 = dma.done [#allocation5], 512
    $region37: #{tpu_custom_call.1} parent=1 // pred_fallthru
      _
    %1059 = vsyncpa [#allocation4], 1
    %1060 = vsyncpa [#allocation5], 1

</llo_original>
